<compile_context>
chip_gen: v6e
topology: v6e:2x2x1
jax: 0.10.0
libtpu: 0.0.40
codegen_flags: <defaults>
</compile_context>

<pallas_src>
import functools

import jax
import jax.numpy as jnp
from jax import lax
from jax.experimental import pallas as pl
from jax.experimental.pallas import tpu as pltpu

LN_EPS = 1e-5   # nn.LayerNorm default
LANE = 128      # TPU lane width


def _round_up(n, m):
    return ((n + m - 1) // m) * m


def _tpu_vmem_and_cores():
    """Physical VMEM bytes per TensorCore and an estimate of TCs per chip."""
    try:
        vmem = int(pltpu.get_tpu_info().vmem_capacity_bytes)
    except Exception:  # non-TPU tracing environments / older runtimes
        vmem = 128 * 1024 * 1024
    # v7x exposes 64 MiB per TC and has 2 TCs/chip; v5e/v6e have 128 MiB and 1 TC.
    num_cores = 2 if vmem <= 64 * 1024 * 1024 else 1
    return vmem, num_cores


def _layernorm(y, gamma, beta, inv_e, lane_mask):
    """LayerNorm over a (possibly zero-padded) last dim; stats use the real width.

    Padded lanes of `y` must be zero (guaranteed by zero-padded weights/biases),
    and gamma/beta are zero on padded lanes so the output stays zero there.
    """
    mean = jnp.sum(y, axis=-1, keepdims=True) * inv_e          # padded lanes are 0
    d = y - mean
    if lane_mask is not None:
        d = d * lane_mask                                       # exclude pads from variance
    var = jnp.sum(d * d, axis=-1, keepdims=True) * inv_e
    inv = lax.rsqrt(var + LN_EPS)
    return (y - mean) * inv * gamma + beta


def transformer_block_kernel(
    x_ref,
    wqkv_ref, bqkv_ref,
    wo_ref,
    w1_ref, b1_ref, w2_ref,
    vec_ref,                      # (6, Ep) rows: bo, b2, gamma1, beta1, gamma2, beta2
    o_ref,
    *, embed_dim, compute_dtype,
):
    bb, s, ep = x_ref.shape
    rows = bb * s
    inv_e = 1.0 / embed_dim
    exact_recip = jnp.dtype(compute_dtype) == jnp.dtype(jnp.float32)

    if ep != embed_dim:
        lane_ids = lax.broadcasted_iota(jnp.int32, (1, ep), 1)
        lane_mask = (lane_ids < embed_dim).astype(jnp.float32)
    else:
        lane_mask = None

    vecs = vec_ref[...]                                  # (6, ep) f32
    bo, b2 = vecs[0:1, :], vecs[1:2, :]
    g1, be1 = vecs[2:3, :], vecs[3:4, :]
    g2, be2 = vecs[4:5, :], vecs[5:6, :]

    x3 = x_ref[...]                                      # (bb, s, ep) f32
    x2 = x3.reshape(rows, ep)                            # fold (batch, seq) -> rows
    xc = x2.astype(compute_dtype)

    # --- fused Q/K/V projection: one (rows, ep) x (ep, 3*ep) MXU pass ---
    qkv = (jnp.dot(xc, wqkv_ref[...], preferred_element_type=jnp.float32)
           + bqkv_ref[...])                              # (rows, 3*ep) f32
    scale = embed_dim ** -0.5                            # folded into Q
    q3 = (qkv[:, :ep] * scale).astype(compute_dtype).reshape(bb, s, ep)
    k3 = qkv[:, ep:2 * ep].astype(compute_dtype).reshape(bb, s, ep)
    v3 = qkv[:, 2 * ep:].astype(compute_dtype).reshape(bb, s, ep)

    # --- scaled dot-product attention (single head, batched over bb) ---
    scores = lax.dot_general(q3, k3, (((2,), (2,)), ((0,), (0,))),
                             preferred_element_type=jnp.float32)    # (bb, s, s)
    scores = scores - jnp.max(scores, axis=-1, keepdims=True)
    p = jnp.exp(scores)
    denom = jnp.sum(p, axis=-1, keepdims=True)
    if exact_recip:
        p = p / denom                                    # tight f32 path
    else:
        p = p * pl.reciprocal(denom, approx=True)        # EUP slot: effectively free
    attn = lax.dot_general(p.astype(compute_dtype), v3,
                           (((2,), (1,)), ((0,), (0,))),
                           preferred_element_type=jnp.float32)      # (bb, s, ep)
    attn2 = attn.reshape(rows, ep).astype(compute_dtype)

    # --- output projection + residual + LayerNorm 1 ---
    attn_o = jnp.dot(attn2, wo_ref[...], preferred_element_type=jnp.float32) + bo
    h = x2 + attn_o                                      # dropout(p=0.0) == identity
    h = _layernorm(h, g1, be1, inv_e, lane_mask)

    # --- FFN (Linear -> ReLU -> Linear) + residual + LayerNorm 2 ---
    f = (jnp.dot(h.astype(compute_dtype), w1_ref[...],
                 preferred_element_type=jnp.float32) + b1_ref[...])
    f = jnp.maximum(f, 0.0)
    f = (jnp.dot(f.astype(compute_dtype), w2_ref[...],
                 preferred_element_type=jnp.float32) + b2)
    out = _layernorm(h + f, g2, be2, inv_e, lane_mask)

    o_ref[...] = out.reshape(bb, s, ep).astype(o_ref.dtype)


def prepare_params(params, *, compute_dtype=jnp.bfloat16):
    """One-time padding / casting / packing of the raw f32 parameters.

    Zero padding is arithmetically neutral: padded weight rows/cols are zero and
    biases / LayerNorm gamma+beta are zero on padded lanes.
    """
    E = params["wq"].shape[0]
    F = params["w1"].shape[1]
    Ep = _round_up(E, LANE)
    Fp = _round_up(F, LANE)

    def pad2(a, r, c, dtype):
        return jnp.pad(a, ((0, r - a.shape[0]), (0, c - a.shape[1]))).astype(dtype)

    wqkv = jnp.concatenate([pad2(params["wq"], Ep, Ep, compute_dtype),
                            pad2(params["wk"], Ep, Ep, compute_dtype),
                            pad2(params["wv"], Ep, Ep, compute_dtype)], axis=1)
    bqkv = jnp.concatenate([pad2(params["bq"], 1, Ep, jnp.float32),
                            pad2(params["bk"], 1, Ep, jnp.float32),
                            pad2(params["bv"], 1, Ep, jnp.float32)], axis=1)
    vecs = jnp.concatenate([pad2(params["bo"], 1, Ep, jnp.float32),
                            pad2(params["b2"], 1, Ep, jnp.float32),
                            pad2(params["gamma1"], 1, Ep, jnp.float32),
                            pad2(params["beta1"], 1, Ep, jnp.float32),
                            pad2(params["gamma2"], 1, Ep, jnp.float32),
                            pad2(params["beta2"], 1, Ep, jnp.float32)], axis=0)
    return {
        "embed_dim": E, "ff_dim": F, "Ep": Ep, "Fp": Fp,
        "compute_dtype": compute_dtype,
        "wqkv": wqkv, "bqkv": bqkv,
        "wo": pad2(params["wo"], Ep, Ep, compute_dtype),
        "w1": pad2(params["w1"], Ep, Fp, compute_dtype),
        "b1": pad2(params["b1"], 1, Fp, jnp.float32),
        "w2": pad2(params["w2"], Fp, Ep, compute_dtype),
        "vecs": vecs,
    }


def _choose_block_batch(B, S, Ep, Fp, weight_bytes, vmem_budget, num_cores, cd_size):
    """Pick batch elements per grid step: fill the MXU M dim, stay inside VMEM."""
    # Rough per-row / per-batch-element footprint of one grid step.
    per_row = (2 * 2 * Ep * 4                       # x + out, double-buffered, f32
               + 3 * Ep * (4 + cd_size)             # fused qkv (f32) + compute copies
               + 4 * Ep * 4 + Ep * cd_size          # attn / h / out temporaries
               + Fp * (4 + cd_size))                # FFN hidden
    per_elem = S * per_row + S * S * (2 * 4 + cd_size)   # scores + p (+ cast)
    avail = max(vmem_budget - weight_bytes, per_elem)
    bb_vmem = max(1, int(avail // per_elem))

    target_rows = 512                               # MXU M fill (multiple of 256)
    bb = max(1, min(B, max(1, target_rows // max(1, S)), bb_vmem))

    if num_cores >= 2 and B >= 2:
        # v7x only: split across the two TensorCores, but only if each step still
        # keeps >=256 rows of matmul work.
        bb_two = pl.cdiv(B, 2)
        if bb_two * S >= 256:
            bb = min(bb, bb_two)
    return int(bb)


def single_head_transformer_block(x, prep, *, block_batch=None,
                                  single_buffer_weights=True):
    """x: (B, S, E) float32. prep: output of prepare_params()."""
    B, S, E = x.shape
    assert E == prep["embed_dim"], "x embed dim does not match prepared params"
    Ep, Fp = prep["Ep"], prep["Fp"]
    F = prep["ff_dim"]
    compute_dtype = prep["compute_dtype"]
    cd_size = jnp.dtype(compute_dtype).itemsize

    physical_vmem, num_cores = _tpu_vmem_and_cores()
    # Never ask the compiler for more than ~3/4 of physical VMEM (48 MiB on v7x).
    vmem_budget = int(min(physical_vmem * 3 // 4, 100 * 1024 * 1024))

    weight_bytes = ((4 * Ep * Ep + 2 * Ep * Fp) * cd_size   # wqkv, wo, w1, w2
                    + (3 * Ep + Fp + 6 * Ep) * 4)           # bqkv, b1, packed vecs

    if block_batch is None:
        block_batch = _choose_block_batch(B, S, Ep, Fp, weight_bytes,
                                          vmem_budget, num_cores, cd_size)
    steps = pl.cdiv(B, block_batch)
    if num_cores >= 2 and steps > 1 and steps % 2 == 1:
        steps += 1                                   # balance both v7x TensorCores
    Bp = steps * block_batch
    grid = (steps,)

    # Pad x only if needed (padded rows are wasted-but-correct work, sliced away).
    if Bp != B or Ep != E:
        x_p = jnp.pad(x, ((0, Bp - B), (0, 0), (0, Ep - E)))
    else:
        x_p = x

    def run(single_buffer):
        def w_spec(shape):
            # Constant block index -> the block never changes across the grid;
            # single-buffer it so weights are not held twice in VMEM.
            if single_buffer:
                return pl.BlockSpec(shape, lambda b: (0, 0),
                                    pipeline_mode=pl.Buffered(1))
            return pl.BlockSpec(shape, lambda b: (0, 0))

        in_specs = [
            pl.BlockSpec((block_batch, S, Ep), lambda b: (b, 0, 0)),   # x (streamed)
            w_spec((Ep, 3 * Ep)), w_spec((1, 3 * Ep)),                 # wqkv, bqkv
            w_spec((Ep, Ep)),                                          # wo
            w_spec((Ep, Fp)), w_spec((1, Fp)), w_spec((Fp, Ep)),       # w1, b1, w2
            w_spec((6, Ep)),                                           # packed vecs
        ]
        out_spec = pl.BlockSpec((block_batch, S, Ep), lambda b: (b, 0, 0))

        # Advisory cost model (real, unpadded sizes).
        flops = 2 * B * S * (4 * E * E + 2 * S * E + 2 * E * F)
        transcendentals = B * S * S + 3 * B * S
        bytes_accessed = 2 * Bp * S * Ep * 4 + weight_bytes

        # Explicit VMEM budget with headroom, clamped by the per-generation cap.
        act_bytes = 2 * 2 * block_batch * S * Ep * 4
        tmp_bytes = (block_batch * S * ((7 * Ep + Fp) * 4 + (4 * Ep + Fp) * cd_size)
                     + block_batch * S * S * (8 + cd_size))
        need = weight_bytes * (1 if single_buffer else 2) + act_bytes + tmp_bytes
        vmem_limit = int(max(32 * 1024 * 1024, min(vmem_budget, 2 * need)))

        kernel = functools.partial(transformer_block_kernel,
                                   embed_dim=E, compute_dtype=compute_dtype)
        return pl.pallas_call(
            kernel,
            out_shape=jax.ShapeDtypeStruct((Bp, S, Ep), x.dtype),
            grid_spec=pltpu.PrefetchScalarGridSpec(
                num_scalar_prefetch=0,
                grid=grid,
                in_specs=in_specs,
                out_specs=out_spec),
            compiler_params=pltpu.CompilerParams(
                dimension_semantics=("parallel",),
                vmem_limit_bytes=vmem_limit),
            cost_estimate=pl.CostEstimate(
                flops=int(flops),
                transcendentals=int(transcendentals),
                bytes_accessed=int(bytes_accessed)),
        )(
            x_p,
            prep["wqkv"], prep["bqkv"],
            prep["wo"],
            prep["w1"], prep["b1"], prep["w2"],
            prep["vecs"],
        )

    try:
        out_p = run(single_buffer_weights)
    except pltpu.LoweringException:
        if not single_buffer_weights:
            raise
        # Fallback only for builds that reject single-buffered (Buffered(1)) specs.
        out_p = run(False)

    if Bp != B or Ep != E:
        return out_p[:B, :, :E]
    return out_p


def init_params(key, embed_dim, ff_dim):
    ks = jax.random.split(key, 12)
    scale = 0.05

    def w(k, shape):
        return (scale * jax.random.normal(k, shape)).astype(jnp.float32)

    return {
        "wq": w(ks[0], (embed_dim, embed_dim)), "bq": w(ks[1], (1, embed_dim)),
        "wk": w(ks[2], (embed_dim, embed_dim)), "bk": w(ks[3], (1, embed_dim)),
        "wv": w(ks[4], (embed_dim, embed_dim)), "bv": w(ks[5], (1, embed_dim)),
        "wo": w(ks[6], (embed_dim, embed_dim)), "bo": w(ks[7], (1, embed_dim)),
        "w1": w(ks[8], (embed_dim, ff_dim)),    "b1": w(ks[9], (1, ff_dim)),
        "w2": w(ks[10], (ff_dim, embed_dim)),   "b2": w(ks[11], (1, embed_dim)),
        # LayerNorm affine params: PyTorch inits weight=1, bias=0
        "gamma1": jnp.ones((1, embed_dim), jnp.float32),
        "beta1": jnp.zeros((1, embed_dim), jnp.float32),
        "gamma2": jnp.ones((1, embed_dim), jnp.float32),
        "beta2": jnp.zeros((1, embed_dim), jnp.float32),
    }


def reference_forward(x, p):
    """Pure-JAX f32 reference mirroring the PyTorch forward (mask=None, dropout=0)."""
    E = x.shape[-1]
    q = x @ p["wq"] + p["bq"]
    k = x @ p["wk"] + p["bk"]
    v = x @ p["wv"] + p["bv"]
    scores = jnp.einsum("bqe,bke->bqk", q, k) / (E ** 0.5)
    attn_w = jax.nn.softmax(scores, axis=-1)
    attn = jnp.einsum("bqk,bke->bqe", attn_w, v)
    attn = attn @ p["wo"] + p["bo"]

    def ln(y, g, b):
        m = jnp.mean(y, -1, keepdims=True)
        var = jnp.mean((y - m) ** 2, -1, keepdims=True)
        return (y - m) / jnp.sqrt(var + LN_EPS) * g + b

    h = ln(x + attn, p["gamma1"], p["beta1"])
    f = jnp.maximum(h @ p["w1"] + p["b1"], 0.0) @ p["w2"] + p["b2"]
    return ln(h + f, p["gamma2"], p["beta2"])


if __name__ == "__main__":
    batch, seq_len, embed_dim, ff_dim = 2, 8, 32, 64

    key = jax.random.PRNGKey(0)
    kx, kp = jax.random.split(key)
    x = jax.random.normal(kx, (batch, seq_len, embed_dim), dtype=jnp.float32)
    params = init_params(kp, embed_dim, ff_dim)

    ref = reference_forward(x, params)

    # f32 compute path: tight check against the pure-JAX reference (exact divide).
    prep_f32 = prepare_params(params, compute_dtype=jnp.float32)
    out_f32 = jax.block_until_ready(single_head_transformer_block(x, prep_f32))
    assert out_f32.shape == (batch, seq_len, embed_dim)
    assert jnp.allclose(out_f32, ref, atol=2e-3, rtol=2e-3), "f32 mismatch vs reference"

    # bf16 matmul operands (f32 accumulation/stats): recommended production path.
    prep_bf16 = prepare_params(params, compute_dtype=jnp.bfloat16)
    out_bf16 = jax.block_until_ready(single_head_transformer_block(x, prep_bf16))
    assert out_bf16.shape == (batch, seq_len, embed_dim)
    assert jnp.allclose(out_bf16, ref, atol=5e-2, rtol=5e-2), "bf16 mismatch vs reference"

    print("KERNEL_OK")
</pallas_src>

<mosaic_0001>
module attributes {stable_mosaic.version = 11 : i64} {
  func.func @transformer_block_kernel(%arg0: i32, %arg1: memref<2x8x128xf32, #tpu.memory_space<vmem>>, %arg2: memref<128x384xf32, #tpu.memory_space<vmem>>, %arg3: memref<1x384xf32, #tpu.memory_space<vmem>>, %arg4: memref<128x128xf32, #tpu.memory_space<vmem>>, %arg5: memref<128x128xf32, #tpu.memory_space<vmem>>, %arg6: memref<1x128xf32, #tpu.memory_space<vmem>>, %arg7: memref<128x128xf32, #tpu.memory_space<vmem>>, %arg8: memref<6x128xf32, #tpu.memory_space<vmem>>, %arg9: memref<2x8x128xf32, #tpu.memory_space<vmem>>) attributes {dimension_semantics = [#tpu.dimension_semantics<parallel>], iteration_bounds = array<i64: 1>, scalar_prefetch = 0 : i64, scratch_operands = 0 : i64, tpu.core_type = #tpu.core_type<tc>, window_params = [{transform_indices = @transform_0, window_bounds = array<i64: 2, 8, 128>}, {pipeline_mode = #tpu.pipeline_mode<synchronous>, transform_indices = @transform_1, window_bounds = array<i64: 128, 384>}, {pipeline_mode = #tpu.pipeline_mode<synchronous>, transform_indices = @transform_2, window_bounds = array<i64: 1, 384>}, {pipeline_mode = #tpu.pipeline_mode<synchronous>, transform_indices = @transform_3, window_bounds = array<i64: 128, 128>}, {pipeline_mode = #tpu.pipeline_mode<synchronous>, transform_indices = @transform_4, window_bounds = array<i64: 128, 128>}, {pipeline_mode = #tpu.pipeline_mode<synchronous>, transform_indices = @transform_5, window_bounds = array<i64: 1, 128>}, {pipeline_mode = #tpu.pipeline_mode<synchronous>, transform_indices = @transform_6, window_bounds = array<i64: 128, 128>}, {pipeline_mode = #tpu.pipeline_mode<synchronous>, transform_indices = @transform_7, window_bounds = array<i64: 6, 128>}, {transform_indices = @transform_8, window_bounds = array<i64: 2, 8, 128>}]} {
    %0 = tpu.iota {dimensions = array<i32: 1>} : vector<1x128xi32>
    %c32_i32 = arith.constant 32 : i32
    %1 = vector.broadcast %c32_i32 : i32 to vector<1x128xi32>
    %2 = arith.cmpi slt, %0, %1 : vector<1x128xi32>
    %3 = arith.extui %2 : vector<1x128xi1> to vector<1x128xi32>
    %4 = arith.sitofp %3 : vector<1x128xi32> to vector<1x128xf32>
    %c0 = arith.constant 0 : index
    %c0_0 = arith.constant 0 : index
    %5 = vector.load %arg8[%c0, %c0_0] : memref<6x128xf32, #tpu.memory_space<vmem>>, vector<6x128xf32>
    %6 = vector.extract_strided_slice %5 {offsets = [0, 0], sizes = [1, 128], strides = [1, 1]} : vector<6x128xf32> to vector<1x128xf32>
    %7 = vector.extract_strided_slice %5 {offsets = [1, 0], sizes = [1, 128], strides = [1, 1]} : vector<6x128xf32> to vector<1x128xf32>
    %8 = vector.extract_strided_slice %5 {offsets = [2, 0], sizes = [1, 128], strides = [1, 1]} : vector<6x128xf32> to vector<1x128xf32>
    %9 = vector.extract_strided_slice %5 {offsets = [3, 0], sizes = [1, 128], strides = [1, 1]} : vector<6x128xf32> to vector<1x128xf32>
    %10 = vector.extract_strided_slice %5 {offsets = [4, 0], sizes = [1, 128], strides = [1, 1]} : vector<6x128xf32> to vector<1x128xf32>
    %11 = vector.extract_strided_slice %5 {offsets = [5, 0], sizes = [1, 128], strides = [1, 1]} : vector<6x128xf32> to vector<1x128xf32>
    %c0_1 = arith.constant 0 : index
    %c0_2 = arith.constant 0 : index
    %c0_3 = arith.constant 0 : index
    %12 = vector.load %arg1[%c0_1, %c0_2, %c0_3] : memref<2x8x128xf32, #tpu.memory_space<vmem>>, vector<2x8x128xf32>
    %13 = vector.shape_cast %12 : vector<2x8x128xf32> to vector<16x128xf32>
    %c0_4 = arith.constant 0 : index
    %c0_5 = arith.constant 0 : index
    %14 = vector.load %arg2[%c0_4, %c0_5] : memref<128x384xf32, #tpu.memory_space<vmem>>, vector<128x384xf32>
    %cst = arith.constant dense<0.000000e+00> : vector<16x384xf32>
    %15 = tpu.matmul %13, %14, %cst {dimension_numbers = #tpu.dot_dimension_numbers<[1], [0], [0], [1], [0, 0, 1, 1], [], []>} : vector<16x128xf32>, vector<128x384xf32>, vector<16x384xf32> -> vector<16x384xf32>
    %c0_6 = arith.constant 0 : index
    %c0_7 = arith.constant 0 : index
    %16 = vector.load %arg3[%c0_6, %c0_7] : memref<1x384xf32, #tpu.memory_space<vmem>>, vector<1x384xf32>
    %17 = vector.broadcast %16 : vector<1x384xf32> to vector<16x384xf32>
    %18 = arith.addf %15, %17 : vector<16x384xf32>
    %19 = vector.extract_strided_slice %18 {offsets = [0, 0], sizes = [16, 128], strides = [1, 1]} : vector<16x384xf32> to vector<16x128xf32>
    %cst_8 = arith.constant 0.176776692 : f32
    %20 = vector.broadcast %cst_8 : f32 to vector<16x128xf32>
    %21 = arith.mulf %19, %20 : vector<16x128xf32>
    %22 = vector.shape_cast %21 : vector<16x128xf32> to vector<2x8x128xf32>
    %23 = vector.extract_strided_slice %18 {offsets = [0, 128], sizes = [16, 128], strides = [1, 1]} : vector<16x384xf32> to vector<16x128xf32>
    %24 = vector.shape_cast %23 : vector<16x128xf32> to vector<2x8x128xf32>
    %25 = vector.extract_strided_slice %18 {offsets = [0, 256], sizes = [16, 128], strides = [1, 1]} : vector<16x384xf32> to vector<16x128xf32>
    %26 = vector.shape_cast %25 : vector<16x128xf32> to vector<2x8x128xf32>
    %cst_9 = arith.constant dense<0.000000e+00> : vector<2x8x8xf32>
    %27 = tpu.matmul %22, %24, %cst_9 {dimension_numbers = #tpu.dot_dimension_numbers<[2], [2], [1], [1], [0, 0, 0, 1, 1, 1], [0], [0]>} : vector<2x8x128xf32>, vector<2x8x128xf32>, vector<2x8x8xf32> -> vector<2x8x8xf32>
    %cst_10 = arith.constant dense<0xFF800000> : vector<2x8xf32>
    %28 = vector.multi_reduction <maximumf>, %27, %cst_10 [2] : vector<2x8x8xf32> to vector<2x8xf32>
    %29 = vector.shape_cast %28 : vector<2x8xf32> to vector<2x8x1xf32>
    %30 = vector.broadcast %29 : vector<2x8x1xf32> to vector<2x8x8xf32>
    %31 = arith.subf %27, %30 : vector<2x8x8xf32>
    %32 = math.exp %31 : vector<2x8x8xf32>
    %cst_11 = arith.constant dense<0.000000e+00> : vector<2x8xf32>
    %33 = vector.multi_reduction <add>, %32, %cst_11 [2] : vector<2x8x8xf32> to vector<2x8xf32>
    %34 = vector.shape_cast %33 : vector<2x8xf32> to vector<2x8x1xf32>
    %35 = vector.broadcast %34 : vector<2x8x1xf32> to vector<2x8x8xf32>
    %36 = arith.divf %32, %35 : vector<2x8x8xf32>
    %cst_12 = arith.constant dense<0.000000e+00> : vector<2x8x128xf32>
    %37 = tpu.matmul %36, %26, %cst_12 {dimension_numbers = #tpu.dot_dimension_numbers<[2], [1], [1], [2], [0, 0, 0, 1, 1, 2], [0], [0]>} : vector<2x8x8xf32>, vector<2x8x128xf32>, vector<2x8x128xf32> -> vector<2x8x128xf32>
    %38 = vector.shape_cast %37 : vector<2x8x128xf32> to vector<16x128xf32>
    %c0_13 = arith.constant 0 : index
    %c0_14 = arith.constant 0 : index
    %39 = vector.load %arg4[%c0_13, %c0_14] : memref<128x128xf32, #tpu.memory_space<vmem>>, vector<128x128xf32>
    %cst_15 = arith.constant dense<0.000000e+00> : vector<16x128xf32>
    %40 = tpu.matmul %38, %39, %cst_15 {dimension_numbers = #tpu.dot_dimension_numbers<[1], [0], [0], [1], [0, 0, 1, 1], [], []>} : vector<16x128xf32>, vector<128x128xf32>, vector<16x128xf32> -> vector<16x128xf32>
    %41 = vector.broadcast %6 : vector<1x128xf32> to vector<16x128xf32>
    %42 = arith.addf %40, %41 : vector<16x128xf32>
    %43 = arith.addf %13, %42 : vector<16x128xf32>
    %cst_16 = arith.constant dense<0.000000e+00> : vector<16xf32>
    %44 = vector.multi_reduction <add>, %43, %cst_16 [1] : vector<16x128xf32> to vector<16xf32>
    %45 = vector.shape_cast %44 : vector<16xf32> to vector<16x1xf32>
    %cst_17 = arith.constant 3.125000e-02 : f32
    %46 = vector.broadcast %cst_17 : f32 to vector<16x1xf32>
    %47 = arith.mulf %45, %46 : vector<16x1xf32>
    %48 = vector.broadcast %47 : vector<16x1xf32> to vector<16x128xf32>
    %49 = arith.subf %43, %48 : vector<16x128xf32>
    %50 = vector.broadcast %4 : vector<1x128xf32> to vector<16x128xf32>
    %51 = arith.mulf %49, %50 : vector<16x128xf32>
    %52 = arith.mulf %51, %51 : vector<16x128xf32>
    %cst_18 = arith.constant dense<0.000000e+00> : vector<16xf32>
    %53 = vector.multi_reduction <add>, %52, %cst_18 [1] : vector<16x128xf32> to vector<16xf32>
    %54 = vector.shape_cast %53 : vector<16xf32> to vector<16x1xf32>
    %cst_19 = arith.constant 3.125000e-02 : f32
    %55 = vector.broadcast %cst_19 : f32 to vector<16x1xf32>
    %56 = arith.mulf %54, %55 : vector<16x1xf32>
    %cst_20 = arith.constant 9.99999974E-6 : f32
    %57 = vector.broadcast %cst_20 : f32 to vector<16x1xf32>
    %58 = arith.addf %56, %57 : vector<16x1xf32>
    %59 = math.rsqrt %58 : vector<16x1xf32>
    %60 = vector.broadcast %47 : vector<16x1xf32> to vector<16x128xf32>
    %61 = arith.subf %43, %60 : vector<16x128xf32>
    %62 = vector.broadcast %59 : vector<16x1xf32> to vector<16x128xf32>
    %63 = arith.mulf %61, %62 : vector<16x128xf32>
    %64 = vector.broadcast %8 : vector<1x128xf32> to vector<16x128xf32>
    %65 = arith.mulf %63, %64 : vector<16x128xf32>
    %66 = vector.broadcast %9 : vector<1x128xf32> to vector<16x128xf32>
    %67 = arith.addf %65, %66 : vector<16x128xf32>
    %c0_21 = arith.constant 0 : index
    %c0_22 = arith.constant 0 : index
    %68 = vector.load %arg5[%c0_21, %c0_22] : memref<128x128xf32, #tpu.memory_space<vmem>>, vector<128x128xf32>
    %cst_23 = arith.constant dense<0.000000e+00> : vector<16x128xf32>
    %69 = tpu.matmul %67, %68, %cst_23 {dimension_numbers = #tpu.dot_dimension_numbers<[1], [0], [0], [1], [0, 0, 1, 1], [], []>} : vector<16x128xf32>, vector<128x128xf32>, vector<16x128xf32> -> vector<16x128xf32>
    %c0_24 = arith.constant 0 : index
    %c0_25 = arith.constant 0 : index
    %70 = vector.load %arg6[%c0_24, %c0_25] : memref<1x128xf32, #tpu.memory_space<vmem>>, vector<1x128xf32>
    %71 = vector.broadcast %70 : vector<1x128xf32> to vector<16x128xf32>
    %72 = arith.addf %69, %71 : vector<16x128xf32>
    %cst_26 = arith.constant 0.000000e+00 : f32
    %73 = vector.broadcast %cst_26 : f32 to vector<16x128xf32>
    %74 = arith.maximumf %72, %73 : vector<16x128xf32>
    %c0_27 = arith.constant 0 : index
    %c0_28 = arith.constant 0 : index
    %75 = vector.load %arg7[%c0_27, %c0_28] : memref<128x128xf32, #tpu.memory_space<vmem>>, vector<128x128xf32>
    %cst_29 = arith.constant dense<0.000000e+00> : vector<16x128xf32>
    %76 = tpu.matmul %74, %75, %cst_29 {dimension_numbers = #tpu.dot_dimension_numbers<[1], [0], [0], [1], [0, 0, 1, 1], [], []>} : vector<16x128xf32>, vector<128x128xf32>, vector<16x128xf32> -> vector<16x128xf32>
    %77 = vector.broadcast %7 : vector<1x128xf32> to vector<16x128xf32>
    %78 = arith.addf %76, %77 : vector<16x128xf32>
    %79 = arith.addf %67, %78 : vector<16x128xf32>
    %cst_30 = arith.constant dense<0.000000e+00> : vector<16xf32>
    %80 = vector.multi_reduction <add>, %79, %cst_30 [1] : vector<16x128xf32> to vector<16xf32>
    %81 = vector.shape_cast %80 : vector<16xf32> to vector<16x1xf32>
    %cst_31 = arith.constant 3.125000e-02 : f32
    %82 = vector.broadcast %cst_31 : f32 to vector<16x1xf32>
    %83 = arith.mulf %81, %82 : vector<16x1xf32>
    %84 = vector.broadcast %83 : vector<16x1xf32> to vector<16x128xf32>
    %85 = arith.subf %79, %84 : vector<16x128xf32>
    %86 = vector.broadcast %4 : vector<1x128xf32> to vector<16x128xf32>
    %87 = arith.mulf %85, %86 : vector<16x128xf32>
    %88 = arith.mulf %87, %87 : vector<16x128xf32>
    %cst_32 = arith.constant dense<0.000000e+00> : vector<16xf32>
    %89 = vector.multi_reduction <add>, %88, %cst_32 [1] : vector<16x128xf32> to vector<16xf32>
    %90 = vector.shape_cast %89 : vector<16xf32> to vector<16x1xf32>
    %cst_33 = arith.constant 3.125000e-02 : f32
    %91 = vector.broadcast %cst_33 : f32 to vector<16x1xf32>
    %92 = arith.mulf %90, %91 : vector<16x1xf32>
    %cst_34 = arith.constant 9.99999974E-6 : f32
    %93 = vector.broadcast %cst_34 : f32 to vector<16x1xf32>
    %94 = arith.addf %92, %93 : vector<16x1xf32>
    %95 = math.rsqrt %94 : vector<16x1xf32>
    %96 = vector.broadcast %83 : vector<16x1xf32> to vector<16x128xf32>
    %97 = arith.subf %79, %96 : vector<16x128xf32>
    %98 = vector.broadcast %95 : vector<16x1xf32> to vector<16x128xf32>
    %99 = arith.mulf %97, %98 : vector<16x128xf32>
    %100 = vector.broadcast %10 : vector<1x128xf32> to vector<16x128xf32>
    %101 = arith.mulf %99, %100 : vector<16x128xf32>
    %102 = vector.broadcast %11 : vector<1x128xf32> to vector<16x128xf32>
    %103 = arith.addf %101, %102 : vector<16x128xf32>
    %104 = vector.shape_cast %103 : vector<16x128xf32> to vector<2x8x128xf32>
    %c0_35 = arith.constant 0 : index
    %c0_36 = arith.constant 0 : index
    %c0_37 = arith.constant 0 : index
    %105 = vector.load %arg9[%c0_35, %c0_36, %c0_37] : memref<2x8x128xf32, #tpu.memory_space<vmem>>, vector<2x8x128xf32>
    tpu.vector_store %arg9[%c0_35, %c0_36, %c0_37], %104 {strides = array<i32>} : memref<2x8x128xf32, #tpu.memory_space<vmem>>, vector<2x8x128xf32>,
    return
  }
  func.func @transform_0(%arg0: i32) -> (i32, i32, i32) {
    %c0_i32 = arith.constant 0 : i32
    %c0_i32_0 = arith.constant 0 : i32
    %c0_i32_1 = arith.constant 0 : i32
    return %arg0, %c0_i32, %c0_i32_0 : i32, i32, i32
  }
  func.func @transform_1(%arg0: i32) -> (i32, i32) {
    %c0_i32 = arith.constant 0 : i32
    %c0_i32_0 = arith.constant 0 : i32
    %c0_i32_1 = arith.constant 0 : i32
    return %c0_i32, %c0_i32_0 : i32, i32
  }
  func.func @transform_2(%arg0: i32) -> (i32, i32) {
    %c0_i32 = arith.constant 0 : i32
    %c0_i32_0 = arith.constant 0 : i32
    %c0_i32_1 = arith.constant 0 : i32
    return %c0_i32, %c0_i32_0 : i32, i32
  }
  func.func @transform_3(%arg0: i32) -> (i32, i32) {
    %c0_i32 = arith.constant 0 : i32
    %c0_i32_0 = arith.constant 0 : i32
    %c0_i32_1 = arith.constant 0 : i32
    return %c0_i32, %c0_i32_0 : i32, i32
  }
  func.func @transform_4(%arg0: i32) -> (i32, i32) {
    %c0_i32 = arith.constant 0 : i32
    %c0_i32_0 = arith.constant 0 : i32
    %c0_i32_1 = arith.constant 0 : i32
    return %c0_i32, %c0_i32_0 : i32, i32
  }
  func.func @transform_5(%arg0: i32) -> (i32, i32) {
    %c0_i32 = arith.constant 0 : i32
    %c0_i32_0 = arith.constant 0 : i32
    %c0_i32_1 = arith.constant 0 : i32
    return %c0_i32, %c0_i32_0 : i32, i32
  }
  func.func @transform_6(%arg0: i32) -> (i32, i32) {
    %c0_i32 = arith.constant 0 : i32
    %c0_i32_0 = arith.constant 0 : i32
    %c0_i32_1 = arith.constant 0 : i32
    return %c0_i32, %c0_i32_0 : i32, i32
  }
  func.func @transform_7(%arg0: i32) -> (i32, i32) {
    %c0_i32 = arith.constant 0 : i32
    %c0_i32_0 = arith.constant 0 : i32
    %c0_i32_1 = arith.constant 0 : i32
    return %c0_i32, %c0_i32_0 : i32, i32
  }
  func.func @transform_8(%arg0: i32) -> (i32, i32, i32) {
    %c0_i32 = arith.constant 0 : i32
    %c0_i32_0 = arith.constant 0 : i32
    %c0_i32_1 = arith.constant 0 : i32
    return %arg0, %c0_i32, %c0_i32_0 : i32, i32, i32
  }
}

</mosaic_0001>

<llo_original>
// kernel: tpu_custom_call.1
$region0: #{tpu_custom_call.1}
  #allocation0 [shape = 'u32[]', space=smem, size = 0x4, offset = 0x4, fixed_abs, tag = 'smem constant byte address 0x4 - core index']
  #allocation1 [shape = 'u32[144,128]{1,0:T(1,128)}', space=vmem, size = 0x12000, scoped, tag = 'internal scratch']
  %s0 = inlined_call_operand.hbm [shape: f32[2,8,128], index: 0, kind: input, shape index: {}]
  %s1 = inlined_call_operand.hbm [shape: f32[128,384], index: 1, kind: input, shape index: {}]
  %s2 = inlined_call_operand.vmem [shape: f32[1,384], index: 2, kind: input, shape index: {}]
  %s3 = inlined_call_operand.hbm [shape: f32[128,128], index: 3, kind: input, shape index: {}]
  %s4 = inlined_call_operand.hbm [shape: f32[128,128], index: 4, kind: input, shape index: {}]
  %s5 = inlined_call_operand.vmem [shape: f32[1,128], index: 5, kind: input, shape index: {}]
  %s6 = inlined_call_operand.hbm [shape: f32[128,128], index: 6, kind: input, shape index: {}]
  %s7 = inlined_call_operand.vmem [shape: f32[6,128], index: 7, kind: input, shape index: {}]
  %s8 = inlined_call_operand.hbm [shape: f32[2,8,128], index: 8, kind: output, shape index: {}]
  %s9 = sld [smem:[#allocation0]]
  $region62: #{tpu_custom_call.1} parent=0
    _
  %s11 = ssub.s32 1, %s9
  %s12 = scalar_select 0, %s11, %s9
  $region1: #{tpu_custom_call.1} parent=0
    #allocation2 [shape = 'u8[8192]{0}', space=vmem, size = 0x2000, scoped, tag = 'input window, operand 0, single buffered']
    #allocation3 [shape = 's32[1]{0}', space=sflag, size = 0x4, scoped, tag = 'scoped memory for tpu_custom_call.1']
    #allocation4 [shape = 's32[1]{0}', space=sflag, size = 0x4, scoped, tag = 'scoped memory for tpu_custom_call.1']
    #allocation5 [shape = 'u8[196608]{0}', space=vmem, size = 0x30000, scoped, tag = 'input window, operand 1, single buffered']
    #allocation6 [shape = 's32[1]{0}', space=sflag, size = 0x4, scoped, tag = 'scoped memory for tpu_custom_call.1']
    #allocation7 [shape = 'u8[65536]{0}', space=vmem, size = 0x10000, scoped, tag = 'input window, operand 3, single buffered']
    #allocation8 [shape = 'u8[65536]{0}', space=vmem, size = 0x10000, scoped, tag = 'input window, operand 4, single buffered']
    #allocation9 [shape = 's32[1]{0}', space=sflag, size = 0x4, scoped, tag = 'scoped memory for tpu_custom_call.1']
    #allocation10 [shape = 'u8[65536]{0}', space=vmem, size = 0x10000, scoped, tag = 'input window, operand 6, single buffered']
    #allocation11 [shape = 'u8[8192]{0}', space=vmem, size = 0x2000, scoped, tag = 'output window, operand 0, single buffered']
    %13 = vsyncpa [#allocation3], 0
    %14 = vsyncpa [#allocation6], 0
    %15 = vsyncpa [#allocation9], 0
    %16 = vsyncpa [#allocation4], 0
    // Predicated region
    $region2: #{tpu_custom_call.1} parent=1 // pred_check
      _
    $region3: #{tpu_custom_call.1} parent=1 // pred_check_branch
      %18 = sbr.rel (0) target = $region5
    $region4: #{tpu_custom_call.1} parent=1 // pred_region
      %s20 = ssub.s32 256, 256
      %21 = vsyncadd [#allocation3], %s20
      %s22 = sshll.u32 [#allocation2], 4
      %s23 = int_to_ptr.vmem [resolvable:$true] %s22
      %28 = dma.hbm_to_vmem [thread:$0]  %s0, 256, %s23, [#allocation3], 128, 128, 8
    $region5: #{tpu_custom_call.1} parent=1 // pred_fallthru
      _
    // Predicated region
    $region6: #{tpu_custom_call.1} parent=1 // pred_check
      _
    $region7: #{tpu_custom_call.1} parent=1 // pred_check_branch
      %30 = sbr.rel (0) target = $region9
    $region8: #{tpu_custom_call.1} parent=1 // pred_region
      %s32 = ssub.s32 6144, 6144
      %33 = vsyncadd [#allocation6], %s32
      %s34 = sshll.u32 [#allocation5], 4
      %s35 = int_to_ptr.vmem [resolvable:$true] %s34
      %40 = dma.hbm_to_vmem [thread:$0]  %s1, 6144, %s35, [#allocation6], 384, 384, 24
    $region9: #{tpu_custom_call.1} parent=1 // pred_fallthru
      _
    // Predicated region
    $region10: #{tpu_custom_call.1} parent=1 // pred_check
      _
    $region11: #{tpu_custom_call.1} parent=1 // pred_check_branch
      %42 = sbr.rel (0) target = $region13
    $region12: #{tpu_custom_call.1} parent=1 // pred_region
      _
    $region13: #{tpu_custom_call.1} parent=1 // pred_fallthru
      _
    // Predicated region
    $region14: #{tpu_custom_call.1} parent=1 // pred_check
      _
    $region15: #{tpu_custom_call.1} parent=1 // pred_check_branch
      %44 = sbr.rel (0) target = $region17
    $region16: #{tpu_custom_call.1} parent=1 // pred_region
      %s46 = ssub.s32 2048, 2048
      %47 = vsyncadd [#allocation6], %s46
      %s48 = sshll.u32 [#allocation7], 4
      %s49 = int_to_ptr.vmem [resolvable:$true] %s48
      %54 = dma.hbm_to_vmem [thread:$0]  %s3, 2048, %s49, [#allocation6], 128, 128, 8
    $region17: #{tpu_custom_call.1} parent=1 // pred_fallthru
      _
    // Predicated region
    $region18: #{tpu_custom_call.1} parent=1 // pred_check
      _
    $region19: #{tpu_custom_call.1} parent=1 // pred_check_branch
      %56 = sbr.rel (0) target = $region21
    $region20: #{tpu_custom_call.1} parent=1 // pred_region
      %s58 = ssub.s32 2048, 2048
      %59 = vsyncadd [#allocation9], %s58
      %s60 = sshll.u32 [#allocation8], 4
      %s61 = int_to_ptr.vmem [resolvable:$true] %s60
      %66 = dma.hbm_to_vmem [thread:$0]  %s4, 2048, %s61, [#allocation9], 128, 128, 8
    $region21: #{tpu_custom_call.1} parent=1 // pred_fallthru
      _
    // Predicated region
    $region22: #{tpu_custom_call.1} parent=1 // pred_check
      _
    $region23: #{tpu_custom_call.1} parent=1 // pred_check_branch
      %68 = sbr.rel (0) target = $region25
    $region24: #{tpu_custom_call.1} parent=1 // pred_region
      _
    $region25: #{tpu_custom_call.1} parent=1 // pred_fallthru
      _
    // Predicated region
    $region26: #{tpu_custom_call.1} parent=1 // pred_check
      _
    $region27: #{tpu_custom_call.1} parent=1 // pred_check_branch
      %70 = sbr.rel (0) target = $region29
    $region28: #{tpu_custom_call.1} parent=1 // pred_region
      %s72 = ssub.s32 2048, 2048
      %73 = vsyncadd [#allocation9], %s72
      %s74 = sshll.u32 [#allocation10], 4
      %s75 = int_to_ptr.vmem [resolvable:$true] %s74
      %80 = dma.hbm_to_vmem [thread:$0]  %s6, 2048, %s75, [#allocation9], 128, 128, 8
    $region29: #{tpu_custom_call.1} parent=1 // pred_fallthru
      _
    // Predicated region
    $region30: #{tpu_custom_call.1} parent=1 // pred_check
      _
    $region31: #{tpu_custom_call.1} parent=1 // pred_check_branch
      %82 = sbr.rel (0) target = $region33
    $region32: #{tpu_custom_call.1} parent=1 // pred_region
      _
    $region33: #{tpu_custom_call.1} parent=1 // pred_fallthru
      _
    // Predicated region
    $region34: #{tpu_custom_call.1} parent=1 // pred_check
      _
    $region35: #{tpu_custom_call.1} parent=1 // pred_check_branch
      %84 = sbr.rel (0) target = $region37
    $region36: #{tpu_custom_call.1} parent=1 // pred_region
      %85 = dma.done [#allocation3], 256
    $region37: #{tpu_custom_call.1} parent=1 // pred_fallthru
      _
    // Predicated region
    $region38: #{tpu_custom_call.1} parent=1 // pred_check
      _
    $region39: #{tpu_custom_call.1} parent=1 // pred_check_branch
      %87 = sbr.rel (0) target = $region41
    $region40: #{tpu_custom_call.1} parent=1 // pred_region
      %88 = dma.done [#allocation6], 6144
    $region41: #{tpu_custom_call.1} parent=1 // pred_fallthru
      _
    // Predicated region
    $region42: #{tpu_custom_call.1} parent=1 // pred_check
      _
    $region43: #{tpu_custom_call.1} parent=1 // pred_check_branch
      %90 = sbr.rel (0) target = $region45
    $region44: #{tpu_custom_call.1} parent=1 // pred_region
      %91 = dma.done [#allocation6], 2048
    $region45: #{tpu_custom_call.1} parent=1 // pred_fallthru
      _
    // Predicated region
    $region46: #{tpu_custom_call.1} parent=1 // pred_check
      _
    $region47: #{tpu_custom_call.1} parent=1 // pred_check_branch
      %93 = sbr.rel (0) target = $region49
    $region48: #{tpu_custom_call.1} parent=1 // pred_region
      %94 = dma.done [#allocation9], 2048
    $region49: #{tpu_custom_call.1} parent=1 // pred_fallthru
      _
    // Predicated region
    $region50: #{tpu_custom_call.1} parent=1 // pred_check
      _
    $region51: #{tpu_custom_call.1} parent=1 // pred_check_branch
      %96 = sbr.rel (0) target = $region53
    $region52: #{tpu_custom_call.1} parent=1 // pred_region
      %97 = dma.done [#allocation9], 2048
    $region53: #{tpu_custom_call.1} parent=1 // pred_fallthru
      _
    %v98 = vlaneseq
    %v99 = vand.u32 %v98, 127
    %vm100 = vcmp.lt.s32.totalorder %v99, 32
    %v101 = vsel %vm100, 1, 0
    %v102 = vcvt.s32.f32 %v101
    %v103 = vld [vmem:[%s7] sm:$0x3f]
    %v104 = vld [vmem:[#allocation2] sm:$0xff]
    %v105 = vld [vmem:[#allocation2 + $0x8] sm:$0xff]
    %v106 = vld [vmem:[#allocation5] sm:$0xff]
    %v107 = vld [vmem:[#allocation5 + $0x8] sm:$0xff]
    %v108 = vld [vmem:[#allocation5 + $0x10] sm:$0xff]
    %v109 = vld [vmem:[#allocation5 + $0x18] sm:$0xff]
    %v110 = vld [vmem:[#allocation5 + $0x20] sm:$0xff]
    %v111 = vld [vmem:[#allocation5 + $0x28] sm:$0xff]
    %v112 = vld [vmem:[#allocation5 + $0x30] sm:$0xff]
    %v113 = vld [vmem:[#allocation5 + $0x38] sm:$0xff]
    %v114 = vld [vmem:[#allocation5 + $0x40] sm:$0xff]
    %v115 = vld [vmem:[#allocation5 + $0x48] sm:$0xff]
    %v116 = vld [vmem:[#allocation5 + $0x50] sm:$0xff]
    %v117 = vld [vmem:[#allocation5 + $0x58] sm:$0xff]
    %v118 = vld [vmem:[#allocation5 + $0x60] sm:$0xff]
    %v119 = vld [vmem:[#allocation5 + $0x68] sm:$0xff]
    %v120 = vld [vmem:[#allocation5 + $0x70] sm:$0xff]
    %v121 = vld [vmem:[#allocation5 + $0x78] sm:$0xff]
    %v122 = vld [vmem:[#allocation5 + $0x80] sm:$0xff]
    %v123 = vld [vmem:[#allocation5 + $0x88] sm:$0xff]
    %v124 = vld [vmem:[#allocation5 + $0x90] sm:$0xff]
    %v125 = vld [vmem:[#allocation5 + $0x98] sm:$0xff]
    %v126 = vld [vmem:[#allocation5 + $0xa0] sm:$0xff]
    %v127 = vld [vmem:[#allocation5 + $0xa8] sm:$0xff]
    %v128 = vld [vmem:[#allocation5 + $0xb0] sm:$0xff]
    %v129 = vld [vmem:[#allocation5 + $0xb8] sm:$0xff]
    %v130 = vld [vmem:[#allocation5 + $0xc0] sm:$0xff]
    %v131 = vld [vmem:[#allocation5 + $0xc8] sm:$0xff]
    %v132 = vld [vmem:[#allocation5 + $0xd0] sm:$0xff]
    %v133 = vld [vmem:[#allocation5 + $0xd8] sm:$0xff]
    %v134 = vld [vmem:[#allocation5 + $0xe0] sm:$0xff]
    %v135 = vld [vmem:[#allocation5 + $0xe8] sm:$0xff]
    %v136 = vld [vmem:[#allocation5 + $0xf0] sm:$0xff]
    %v137 = vld [vmem:[#allocation5 + $0xf8] sm:$0xff]
    %v138 = vld [vmem:[#allocation5 + $0x100] sm:$0xff]
    %v139 = vld [vmem:[#allocation5 + $0x108] sm:$0xff]
    %v140 = vld [vmem:[#allocation5 + $0x110] sm:$0xff]
    %v141 = vld [vmem:[#allocation5 + $0x118] sm:$0xff]
    %v142 = vld [vmem:[#allocation5 + $0x120] sm:$0xff]
    %v143 = vld [vmem:[#allocation5 + $0x128] sm:$0xff]
    %v144 = vld [vmem:[#allocation5 + $0x130] sm:$0xff]
    %v145 = vld [vmem:[#allocation5 + $0x138] sm:$0xff]
    %v146 = vld [vmem:[#allocation5 + $0x140] sm:$0xff]
    %v147 = vld [vmem:[#allocation5 + $0x148] sm:$0xff]
    %v148 = vld [vmem:[#allocation5 + $0x150] sm:$0xff]
    %v149 = vld [vmem:[#allocation5 + $0x158] sm:$0xff]
    %v150 = vld [vmem:[#allocation5 + $0x160] sm:$0xff]
    %v151 = vld [vmem:[#allocation5 + $0x168] sm:$0xff]
    %v152 = vld [vmem:[#allocation5 + $0x170] sm:$0xff]
    %v153 = vld [vmem:[#allocation5 + $0x178] sm:$0xff]
    %v154 = vld [vmem:[%s2] sm:$0x7]
    %v156 = vlaneseq
    %v157 = vshrl.u32 %v156, 7
    %v158 = vsub.s32 0, %v157
    %v159 = vrot.slane %v154, %v158
    %v160 = vlaneseq
    %v161 = vshrl.u32 %v160, 7
    %v162 = vsub.s32 1, %v161
    %v163 = vrot.slane %v154, %v162
    %v164 = vlaneseq
    %v165 = vshrl.u32 %v164, 7
    %v166 = vsub.s32 2, %v165
    %v167 = vrot.slane %v154, %v166
    %171 = vmatprep.subr.mxu0 %v152
    %172 = vmatpush1.msra.mxu0 %v151
    %173 = vmatprep.subr.mxu0 %v149
    %174 = vmatpush1.msra.mxu0 %v148
    %175 = vmatprep.subr.mxu0 %v146
    %176 = vmatpush1.msra.mxu0 %v145
    %177 = vmatprep.subr.mxu0 %v143
    %178 = vmatpush1.msra.mxu0 %v142
    %179 = vmatprep.subr.mxu0 %v140
    %180 = vmatpush1.msra.mxu0 %v139
    %181 = vmatprep.subr.mxu0 %v137
    %182 = vmatpush1.msra.mxu0 %v136
    %183 = vmatprep.subr.mxu0 %v134
    %184 = vmatpush1.msra.mxu0 %v133
    %185 = vmatprep.subr.mxu0 %v131
    %186 = vmatpush1.msra.mxu0 %v130
    %187 = vmatprep.subr.mxu0 %v128
    %188 = vmatpush1.msra.mxu0 %v127
    %189 = vmatprep.subr.mxu0 %v125
    %190 = vmatpush1.msra.mxu0 %v124
    %191 = vmatprep.subr.mxu0 %v122
    %192 = vmatpush1.msra.mxu0 %v121
    %193 = vmatprep.subr.mxu0 %v119
    %194 = vmatpush1.msra.mxu0 %v118
    %195 = vmatprep.subr.mxu0 %v116
    %196 = vmatpush1.msra.mxu0 %v115
    %197 = vmatprep.subr.mxu0 %v113
    %198 = vmatpush1.msra.mxu0 %v112
    %199 = vmatprep.subr.mxu0 %v110
    %200 = vmatpush1.msra.mxu0 %v109
    %201 = vmatprep.subr.mxu0 %v107
    %202 = vmatpush1.msra.mxu0 %v106
    %203 = vmatprep.subr.mxu0 0.0
    %204 = vmatpush2.msra.mxu0 0.0
    %205 = vmatprep.subr.mxu0 0.0
    %206 = vmatpush2.msra.mxu0 0.0
    %207 = vmatprep.subr.mxu0 0.0
    %208 = vmatpush2.msra.mxu0 0.0
    %209 = vmatprep.subr.mxu0 0.0
    %210 = vmatpush2.msra.mxu0 0.0
    %211 = vmatprep.subr.mxu0 0.0
    %212 = vmatpush2.msra.mxu0 0.0
    %213 = vmatprep.subr.mxu0 0.0
    %214 = vmatpush2.msra.mxu0 0.0
    %215 = vmatprep.subr.mxu0 0.0
    %216 = vmatpush2.msra.mxu0 0.0
    %217 = vmatprep.subr.mxu0 0.0
    %218 = vmatpush2.msra.mxu0 0.0
    %219 = vmatprep.subr.mxu0 0.0
    %220 = vmatpush2.msra.mxu0 0.0
    %221 = vmatprep.subr.mxu0 0.0
    %222 = vmatpush2.msra.mxu0 0.0
    %223 = vmatprep.subr.mxu0 0.0
    %224 = vmatpush2.msra.mxu0 0.0
    %225 = vmatprep.subr.mxu0 0.0
    %226 = vmatpush2.msra.mxu0 0.0
    %227 = vmatprep.subr.mxu0 0.0
    %228 = vmatpush2.msra.mxu0 0.0
    %229 = vmatprep.subr.mxu0 0.0
    %230 = vmatpush2.msra.mxu0 0.0
    %231 = vmatprep.subr.mxu0 0.0
    %232 = vmatpush2.msra.mxu0 0.0
    %233 = vmatprep.subr.mxu0 0.0
    %234 = vmatpush2.msra.mxu0 0.0
    %235 = vmatprep.mubr.f32.mxu0 0.0
    %236 = vmatmul.mubr.f32.gmra.mxu0 %v104
    %v237 = vpop.f32.mrf.mxu0
    %v238 = vadd.f32 %v159, %v237
    %v239 = vpop.f32.mrf.mxu0
    %v240 = vadd.f32 %v163, %v239
    %241 = vmatprep.mubr.f32.mxu0 0.0
    %242 = vmatmul.mubr.f32.gmra.mxu0 %v105
    %v243 = vpop.f32.mrf.mxu0
    %v244 = vadd.f32 %v159, %v243
    %v245 = vpop.f32.mrf.mxu0
    %v246 = vadd.f32 %v163, %v245
    %247 = vdwg.mxu0
    %248 = vmatprep.subr.mxu0 0.0
    %249 = vmatpush1.msra.mxu0 %v153
    %250 = vmatprep.subr.mxu0 0.0
    %251 = vmatpush1.msra.mxu0 %v150
    %252 = vmatprep.subr.mxu0 0.0
    %253 = vmatpush1.msra.mxu0 %v147
    %254 = vmatprep.subr.mxu0 0.0
    %255 = vmatpush1.msra.mxu0 %v144
    %256 = vmatprep.subr.mxu0 0.0
    %257 = vmatpush1.msra.mxu0 %v141
    %258 = vmatprep.subr.mxu0 0.0
    %259 = vmatpush1.msra.mxu0 %v138
    %260 = vmatprep.subr.mxu0 0.0
    %261 = vmatpush1.msra.mxu0 %v135
    %262 = vmatprep.subr.mxu0 0.0
    %263 = vmatpush1.msra.mxu0 %v132
    %264 = vmatprep.subr.mxu0 0.0
    %265 = vmatpush1.msra.mxu0 %v129
    %266 = vmatprep.subr.mxu0 0.0
    %267 = vmatpush1.msra.mxu0 %v126
    %268 = vmatprep.subr.mxu0 0.0
    %269 = vmatpush1.msra.mxu0 %v123
    %270 = vmatprep.subr.mxu0 0.0
    %271 = vmatpush1.msra.mxu0 %v120
    %272 = vmatprep.subr.mxu0 0.0
    %273 = vmatpush1.msra.mxu0 %v117
    %274 = vmatprep.subr.mxu0 0.0
    %275 = vmatpush1.msra.mxu0 %v114
    %276 = vmatprep.subr.mxu0 0.0
    %277 = vmatpush1.msra.mxu0 %v111
    %278 = vmatprep.subr.mxu0 0.0
    %279 = vmatpush1.msra.mxu0 %v108
    %280 = vmatprep.subr.mxu0 0.0
    %281 = vmatpush2.msra.mxu0 0.0
    %282 = vmatprep.subr.mxu0 0.0
    %283 = vmatpush2.msra.mxu0 0.0
    %284 = vmatprep.subr.mxu0 0.0
    %285 = vmatpush2.msra.mxu0 0.0
    %286 = vmatprep.subr.mxu0 0.0
    %287 = vmatpush2.msra.mxu0 0.0
    %288 = vmatprep.subr.mxu0 0.0
    %289 = vmatpush2.msra.mxu0 0.0
    %290 = vmatprep.subr.mxu0 0.0
    %291 = vmatpush2.msra.mxu0 0.0
    %292 = vmatprep.subr.mxu0 0.0
    %293 = vmatpush2.msra.mxu0 0.0
    %294 = vmatprep.subr.mxu0 0.0
    %295 = vmatpush2.msra.mxu0 0.0
    %296 = vmatprep.subr.mxu0 0.0
    %297 = vmatpush2.msra.mxu0 0.0
    %298 = vmatprep.subr.mxu0 0.0
    %299 = vmatpush2.msra.mxu0 0.0
    %300 = vmatprep.subr.mxu0 0.0
    %301 = vmatpush2.msra.mxu0 0.0
    %302 = vmatprep.subr.mxu0 0.0
    %303 = vmatpush2.msra.mxu0 0.0
    %304 = vmatprep.subr.mxu0 0.0
    %305 = vmatpush2.msra.mxu0 0.0
    %306 = vmatprep.subr.mxu0 0.0
    %307 = vmatpush2.msra.mxu0 0.0
    %308 = vmatprep.subr.mxu0 0.0
    %309 = vmatpush2.msra.mxu0 0.0
    %310 = vmatprep.subr.mxu0 0.0
    %311 = vmatpush2.msra.mxu0 0.0
    %312 = vmatprep.mubr.f32.mxu0 0.0
    %313 = vmatmul.mubr.f32.gmra.mxu0 %v104
    %v314 = vpop.f32.mrf.mxu0
    %v315 = vadd.f32 %v167, %v314
    %v316 = vpop.f32.mrf.mxu0
    %317 = vmatprep.mubr.f32.mxu0 0.0
    %318 = vmatmul.mubr.f32.gmra.mxu0 %v105
    %v319 = vpop.f32.mrf.mxu0
    %v320 = vadd.f32 %v167, %v319
    %v321 = vpop.f32.mrf.mxu0
    %322 = vdwg.mxu0
    %v323 = vmul.f32 %v238, 0.17677669
    %v324 = vmul.f32 %v244, 0.17677669
    %325 = vmatprep.subr.mxu0 0.0
    %326 = vmatpush1.xpose.msra.mxu0 0.0
    %327 = vmatprep.subr.mxu0 0.0
    %328 = vmatpush1.xpose.msra.mxu0 0.0
    %329 = vmatprep.subr.mxu0 0.0
    %330 = vmatpush1.xpose.msra.mxu0 0.0
    %331 = vmatprep.subr.mxu0 0.0
    %332 = vmatpush1.xpose.msra.mxu0 0.0
    %333 = vmatprep.subr.mxu0 0.0
    %334 = vmatpush1.xpose.msra.mxu0 0.0
    %335 = vmatprep.subr.mxu0 0.0
    %336 = vmatpush1.xpose.msra.mxu0 0.0
    %337 = vmatprep.subr.mxu0 0.0
    %338 = vmatpush1.xpose.msra.mxu0 0.0
    %339 = vmatprep.subr.mxu0 0.0
    %340 = vmatpush1.xpose.msra.mxu0 0.0
    %341 = vmatprep.subr.mxu0 0.0
    %342 = vmatpush1.xpose.msra.mxu0 0.0
    %343 = vmatprep.subr.mxu0 0.0
    %344 = vmatpush1.xpose.msra.mxu0 0.0
    %345 = vmatprep.subr.mxu0 0.0
    %346 = vmatpush1.xpose.msra.mxu0 0.0
    %347 = vmatprep.subr.mxu0 0.0
    %348 = vmatpush1.xpose.msra.mxu0 0.0
    %349 = vmatprep.subr.mxu0 0.0
    %350 = vmatpush1.xpose.msra.mxu0 0.0
    %351 = vmatprep.subr.mxu0 0.0
    %352 = vmatpush1.xpose.msra.mxu0 0.0
    %353 = vmatprep.subr.mxu0 0.0
    %354 = vmatpush1.xpose.msra.mxu0 0.0
    %355 = vmatprep.subr.mxu0 0.0
    %356 = vmatpush1.xpose.msra.mxu0 %v240
    %357 = vmatprep.subr.mxu0 0.0
    %358 = vmatpush2.xpose.msra.mxu0 0.0
    %359 = vmatprep.subr.mxu0 0.0
    %360 = vmatpush2.xpose.msra.mxu0 0.0
    %361 = vmatprep.subr.mxu0 0.0
    %362 = vmatpush2.xpose.msra.mxu0 0.0
    %363 = vmatprep.subr.mxu0 0.0
    %364 = vmatpush2.xpose.msra.mxu0 0.0
    %365 = vmatprep.subr.mxu0 0.0
    %366 = vmatpush2.xpose.msra.mxu0 0.0
    %367 = vmatprep.subr.mxu0 0.0
    %368 = vmatpush2.xpose.msra.mxu0 0.0
    %369 = vmatprep.subr.mxu0 0.0
    %370 = vmatpush2.xpose.msra.mxu0 0.0
    %371 = vmatprep.subr.mxu0 0.0
    %372 = vmatpush2.xpose.msra.mxu0 0.0
    %373 = vmatprep.subr.mxu0 0.0
    %374 = vmatpush2.xpose.msra.mxu0 0.0
    %375 = vmatprep.subr.mxu0 0.0
    %376 = vmatpush2.xpose.msra.mxu0 0.0
    %377 = vmatprep.subr.mxu0 0.0
    %378 = vmatpush2.xpose.msra.mxu0 0.0
    %379 = vmatprep.subr.mxu0 0.0
    %380 = vmatpush2.xpose.msra.mxu0 0.0
    %381 = vmatprep.subr.mxu0 0.0
    %382 = vmatpush2.xpose.msra.mxu0 0.0
    %383 = vmatprep.subr.mxu0 0.0
    %384 = vmatpush2.xpose.msra.mxu0 0.0
    %385 = vmatprep.subr.mxu0 0.0
    %386 = vmatpush2.xpose.msra.mxu0 0.0
    %387 = vmatprep.subr.mxu0 0.0
    %388 = vmatpush2.xpose.msra.mxu0 0.0
    %389 = vmatprep.mubr.f32.mxu0 0.0
    %390 = vmatmul.mubr.f32.gmra.mxu0 %v323
    %v391 = vpop.f32.mrf.mxu0
    %v392 = vadd.f32 0.0, %v391
    %v393 = vpop.f32.mrf.mxu0
    %394 = vdwg.mxu0
    %395 = vmatprep.subr.mxu0 0.0
    %396 = vmatpush1.xpose.msra.mxu0 0.0
    %397 = vmatprep.subr.mxu0 0.0
    %398 = vmatpush1.xpose.msra.mxu0 0.0
    %399 = vmatprep.subr.mxu0 0.0
    %400 = vmatpush1.xpose.msra.mxu0 0.0
    %401 = vmatprep.subr.mxu0 0.0
    %402 = vmatpush1.xpose.msra.mxu0 0.0
    %403 = vmatprep.subr.mxu0 0.0
    %404 = vmatpush1.xpose.msra.mxu0 0.0
    %405 = vmatprep.subr.mxu0 0.0
    %406 = vmatpush1.xpose.msra.mxu0 0.0
    %407 = vmatprep.subr.mxu0 0.0
    %408 = vmatpush1.xpose.msra.mxu0 0.0
    %409 = vmatprep.subr.mxu0 0.0
    %410 = vmatpush1.xpose.msra.mxu0 0.0
    %411 = vmatprep.subr.mxu0 0.0
    %412 = vmatpush1.xpose.msra.mxu0 0.0
    %413 = vmatprep.subr.mxu0 0.0
    %414 = vmatpush1.xpose.msra.mxu0 0.0
    %415 = vmatprep.subr.mxu0 0.0
    %416 = vmatpush1.xpose.msra.mxu0 0.0
    %417 = vmatprep.subr.mxu0 0.0
    %418 = vmatpush1.xpose.msra.mxu0 0.0
    %419 = vmatprep.subr.mxu0 0.0
    %420 = vmatpush1.xpose.msra.mxu0 0.0
    %421 = vmatprep.subr.mxu0 0.0
    %422 = vmatpush1.xpose.msra.mxu0 0.0
    %423 = vmatprep.subr.mxu0 0.0
    %424 = vmatpush1.xpose.msra.mxu0 0.0
    %425 = vmatprep.subr.mxu0 0.0
    %426 = vmatpush1.xpose.msra.mxu0 %v246
    %427 = vmatprep.subr.mxu0 0.0
    %428 = vmatpush2.xpose.msra.mxu0 0.0
    %429 = vmatprep.subr.mxu0 0.0
    %430 = vmatpush2.xpose.msra.mxu0 0.0
    %431 = vmatprep.subr.mxu0 0.0
    %432 = vmatpush2.xpose.msra.mxu0 0.0
    %433 = vmatprep.subr.mxu0 0.0
    %434 = vmatpush2.xpose.msra.mxu0 0.0
    %435 = vmatprep.subr.mxu0 0.0
    %436 = vmatpush2.xpose.msra.mxu0 0.0
    %437 = vmatprep.subr.mxu0 0.0
    %438 = vmatpush2.xpose.msra.mxu0 0.0
    %439 = vmatprep.subr.mxu0 0.0
    %440 = vmatpush2.xpose.msra.mxu0 0.0
    %441 = vmatprep.subr.mxu0 0.0
    %442 = vmatpush2.xpose.msra.mxu0 0.0
    %443 = vmatprep.subr.mxu0 0.0
    %444 = vmatpush2.xpose.msra.mxu0 0.0
    %445 = vmatprep.subr.mxu0 0.0
    %446 = vmatpush2.xpose.msra.mxu0 0.0
    %447 = vmatprep.subr.mxu0 0.0
    %448 = vmatpush2.xpose.msra.mxu0 0.0
    %449 = vmatprep.subr.mxu0 0.0
    %450 = vmatpush2.xpose.msra.mxu0 0.0
    %451 = vmatprep.subr.mxu0 0.0
    %452 = vmatpush2.xpose.msra.mxu0 0.0
    %453 = vmatprep.subr.mxu0 0.0
    %454 = vmatpush2.xpose.msra.mxu0 0.0
    %455 = vmatprep.subr.mxu0 0.0
    %456 = vmatpush2.xpose.msra.mxu0 0.0
    %457 = vmatprep.subr.mxu0 0.0
    %458 = vmatpush2.xpose.msra.mxu0 0.0
    %459 = vmatprep.mubr.f32.mxu0 0.0
    %460 = vmatmul.mubr.f32.gmra.mxu0 %v324
    %v461 = vpop.f32.mrf.mxu0
    %v462 = vadd.f32 0.0, %v461
    %v463 = vpop.f32.mrf.mxu0
    %464 = vdwg.mxu0
    %vm465 = vcmask 64512
    %v466 = vsel %vm465, %v392, -inf
    %467 = vmax.xlane.f32.xlu0 %v466
    %v468 = vpop.xlane.xlu0 %467
    %v469 = vsel %vm465, %v462, -inf
    %470 = vmax.xlane.f32.xlu0 %v469
    %v471 = vpop.xlane.xlu0 %470
    %v472 = vsub.f32 %v392, %v468
    %v473 = vsub.f32 %v462, %v471
    %v474 = vmul.f32 %v472, 1.442695
    %v475 = vpow.pop %v474
    %v476 = vmul.f32 %v473, 1.442695
    %v477 = vpow.pop %v476
    %v478 = vsel %vm465, %v475, 0.0
    %479 = vadd.xlane.f32.xlu0 %v478
    %v480 = vpop.xlane.xlu0 %479
    %v481 = vsel %vm465, %v477, 0.0
    %482 = vadd.xlane.f32.xlu0 %v481
    %v483 = vpop.xlane.xlu0 %482
    %v484 = vrcp.pop %v480
    %v485 = vmul.f32 %v475, %v484
    %v486 = vrcp.pop %v483
    %v487 = vmul.f32 %v477, %v486
    %v489 = vsel %vm465, %v485, 0
    %491 = vmatprep.subr.mxu0 0.0
    %492 = vmatpush1.msra.mxu0 0.0
    %493 = vmatprep.subr.mxu0 0.0
    %494 = vmatpush1.msra.mxu0 0.0
    %495 = vmatprep.subr.mxu0 0.0
    %496 = vmatpush1.msra.mxu0 0.0
    %497 = vmatprep.subr.mxu0 0.0
    %498 = vmatpush1.msra.mxu0 0.0
    %499 = vmatprep.subr.mxu0 0.0
    %500 = vmatpush1.msra.mxu0 0.0
    %501 = vmatprep.subr.mxu0 0.0
    %502 = vmatpush1.msra.mxu0 0.0
    %503 = vmatprep.subr.mxu0 0.0
    %504 = vmatpush1.msra.mxu0 0.0
    %505 = vmatprep.subr.mxu0 0.0
    %506 = vmatpush1.msra.mxu0 0.0
    %507 = vmatprep.subr.mxu0 0.0
    %508 = vmatpush1.msra.mxu0 0.0
    %509 = vmatprep.subr.mxu0 0.0
    %510 = vmatpush1.msra.mxu0 0.0
    %511 = vmatprep.subr.mxu0 0.0
    %512 = vmatpush1.msra.mxu0 0.0
    %513 = vmatprep.subr.mxu0 0.0
    %514 = vmatpush1.msra.mxu0 0.0
    %515 = vmatprep.subr.mxu0 0.0
    %516 = vmatpush1.msra.mxu0 0.0
    %517 = vmatprep.subr.mxu0 0.0
    %518 = vmatpush1.msra.mxu0 0.0
    %519 = vmatprep.subr.mxu0 0.0
    %520 = vmatpush1.msra.mxu0 0.0
    %521 = vmatprep.subr.mxu0 0.0
    %522 = vmatpush1.msra.mxu0 %v315
    %523 = vmatprep.subr.mxu0 0.0
    %524 = vmatpush2.msra.mxu0 0.0
    %525 = vmatprep.subr.mxu0 0.0
    %526 = vmatpush2.msra.mxu0 0.0
    %527 = vmatprep.subr.mxu0 0.0
    %528 = vmatpush2.msra.mxu0 0.0
    %529 = vmatprep.subr.mxu0 0.0
    %530 = vmatpush2.msra.mxu0 0.0
    %531 = vmatprep.subr.mxu0 0.0
    %532 = vmatpush2.msra.mxu0 0.0
    %533 = vmatprep.subr.mxu0 0.0
    %534 = vmatpush2.msra.mxu0 0.0
    %535 = vmatprep.subr.mxu0 0.0
    %536 = vmatpush2.msra.mxu0 0.0
    %537 = vmatprep.subr.mxu0 0.0
    %538 = vmatpush2.msra.mxu0 0.0
    %539 = vmatprep.subr.mxu0 0.0
    %540 = vmatpush2.msra.mxu0 0.0
    %541 = vmatprep.subr.mxu0 0.0
    %542 = vmatpush2.msra.mxu0 0.0
    %543 = vmatprep.subr.mxu0 0.0
    %544 = vmatpush2.msra.mxu0 0.0
    %545 = vmatprep.subr.mxu0 0.0
    %546 = vmatpush2.msra.mxu0 0.0
    %547 = vmatprep.subr.mxu0 0.0
    %548 = vmatpush2.msra.mxu0 0.0
    %549 = vmatprep.subr.mxu0 0.0
    %550 = vmatpush2.msra.mxu0 0.0
    %551 = vmatprep.subr.mxu0 0.0
    %552 = vmatpush2.msra.mxu0 0.0
    %553 = vmatprep.subr.mxu0 0.0
    %554 = vmatpush2.msra.mxu0 0.0
    %555 = vmatprep.mubr.f32.mxu0 0.0
    %556 = vmatmul.mubr.f32.gmra.mxu0 %v489
    %v557 = vpop.f32.mrf.mxu0
    %v558 = vadd.f32 0.0, %v557
    %v559 = vpop.f32.mrf.mxu0
    %560 = vdwg.mxu0
    %v562 = vsel %vm465, %v487, 0
    %564 = vmatprep.subr.mxu0 0.0
    %565 = vmatpush1.msra.mxu0 0.0
    %566 = vmatprep.subr.mxu0 0.0
    %567 = vmatpush1.msra.mxu0 0.0
    %568 = vmatprep.subr.mxu0 0.0
    %569 = vmatpush1.msra.mxu0 0.0
    %570 = vmatprep.subr.mxu0 0.0
    %571 = vmatpush1.msra.mxu0 0.0
    %572 = vmatprep.subr.mxu0 0.0
    %573 = vmatpush1.msra.mxu0 0.0
    %574 = vmatprep.subr.mxu0 0.0
    %575 = vmatpush1.msra.mxu0 0.0
    %576 = vmatprep.subr.mxu0 0.0
    %577 = vmatpush1.msra.mxu0 0.0
    %578 = vmatprep.subr.mxu0 0.0
    %579 = vmatpush1.msra.mxu0 0.0
    %580 = vmatprep.subr.mxu0 0.0
    %581 = vmatpush1.msra.mxu0 0.0
    %582 = vmatprep.subr.mxu0 0.0
    %583 = vmatpush1.msra.mxu0 0.0
    %584 = vmatprep.subr.mxu0 0.0
    %585 = vmatpush1.msra.mxu0 0.0
    %586 = vmatprep.subr.mxu0 0.0
    %587 = vmatpush1.msra.mxu0 0.0
    %588 = vmatprep.subr.mxu0 0.0
    %589 = vmatpush1.msra.mxu0 0.0
    %590 = vmatprep.subr.mxu0 0.0
    %591 = vmatpush1.msra.mxu0 0.0
    %592 = vmatprep.subr.mxu0 0.0
    %593 = vmatpush1.msra.mxu0 0.0
    %594 = vmatprep.subr.mxu0 0.0
    %595 = vmatpush1.msra.mxu0 %v320
    %596 = vmatprep.subr.mxu0 0.0
    %597 = vmatpush2.msra.mxu0 0.0
    %598 = vmatprep.subr.mxu0 0.0
    %599 = vmatpush2.msra.mxu0 0.0
    %600 = vmatprep.subr.mxu0 0.0
    %601 = vmatpush2.msra.mxu0 0.0
    %602 = vmatprep.subr.mxu0 0.0
    %603 = vmatpush2.msra.mxu0 0.0
    %604 = vmatprep.subr.mxu0 0.0
    %605 = vmatpush2.msra.mxu0 0.0
    %606 = vmatprep.subr.mxu0 0.0
    %607 = vmatpush2.msra.mxu0 0.0
    %608 = vmatprep.subr.mxu0 0.0
    %609 = vmatpush2.msra.mxu0 0.0
    %610 = vmatprep.subr.mxu0 0.0
    %611 = vmatpush2.msra.mxu0 0.0
    %612 = vmatprep.subr.mxu0 0.0
    %613 = vmatpush2.msra.mxu0 0.0
    %614 = vmatprep.subr.mxu0 0.0
    %615 = vmatpush2.msra.mxu0 0.0
    %616 = vmatprep.subr.mxu0 0.0
    %617 = vmatpush2.msra.mxu0 0.0
    %618 = vmatprep.subr.mxu0 0.0
    %619 = vmatpush2.msra.mxu0 0.0
    %620 = vmatprep.subr.mxu0 0.0
    %621 = vmatpush2.msra.mxu0 0.0
    %622 = vmatprep.subr.mxu0 0.0
    %623 = vmatpush2.msra.mxu0 0.0
    %624 = vmatprep.subr.mxu0 0.0
    %625 = vmatpush2.msra.mxu0 0.0
    %626 = vmatprep.subr.mxu0 0.0
    %627 = vmatpush2.msra.mxu0 0.0
    %628 = vmatprep.mubr.f32.mxu0 0.0
    %629 = vmatmul.mubr.f32.gmra.mxu0 %v562
    %v630 = vpop.f32.mrf.mxu0
    %v631 = vadd.f32 0.0, %v630
    %v632 = vpop.f32.mrf.mxu0
    %633 = vdwg.mxu0
    %v634 = vld [vmem:[#allocation7] sm:$0xff]
    %v635 = vld [vmem:[#allocation7 + $0x8] sm:$0xff]
    %v636 = vld [vmem:[#allocation7 + $0x10] sm:$0xff]
    %v637 = vld [vmem:[#allocation7 + $0x18] sm:$0xff]
    %v638 = vld [vmem:[#allocation7 + $0x20] sm:$0xff]
    %v639 = vld [vmem:[#allocation7 + $0x28] sm:$0xff]
    %v640 = vld [vmem:[#allocation7 + $0x30] sm:$0xff]
    %v641 = vld [vmem:[#allocation7 + $0x38] sm:$0xff]
    %v642 = vld [vmem:[#allocation7 + $0x40] sm:$0xff]
    %v643 = vld [vmem:[#allocation7 + $0x48] sm:$0xff]
    %v644 = vld [vmem:[#allocation7 + $0x50] sm:$0xff]
    %v645 = vld [vmem:[#allocation7 + $0x58] sm:$0xff]
    %v646 = vld [vmem:[#allocation7 + $0x60] sm:$0xff]
    %v647 = vld [vmem:[#allocation7 + $0x68] sm:$0xff]
    %v648 = vld [vmem:[#allocation7 + $0x70] sm:$0xff]
    %v649 = vld [vmem:[#allocation7 + $0x78] sm:$0xff]
    %v650 = vlaneseq
    %v651 = vshrl.u32 %v650, 7
    %v652 = vsub.s32 0, %v651
    %v653 = vrot.slane %v103, %v652
    %654 = vmatprep.subr.mxu0 0.0
    %655 = vmatpush1.msra.mxu0 %v649
    %656 = vmatprep.subr.mxu0 0.0
    %657 = vmatpush1.msra.mxu0 %v648
    %658 = vmatprep.subr.mxu0 0.0
    %659 = vmatpush1.msra.mxu0 %v647
    %660 = vmatprep.subr.mxu0 0.0
    %661 = vmatpush1.msra.mxu0 %v646
    %662 = vmatprep.subr.mxu0 0.0
    %663 = vmatpush1.msra.mxu0 %v645
    %664 = vmatprep.subr.mxu0 0.0
    %665 = vmatpush1.msra.mxu0 %v644
    %666 = vmatprep.subr.mxu0 0.0
    %667 = vmatpush1.msra.mxu0 %v643
    %668 = vmatprep.subr.mxu0 0.0
    %669 = vmatpush1.msra.mxu0 %v642
    %670 = vmatprep.subr.mxu0 0.0
    %671 = vmatpush1.msra.mxu0 %v641
    %672 = vmatprep.subr.mxu0 0.0
    %673 = vmatpush1.msra.mxu0 %v640
    %674 = vmatprep.subr.mxu0 0.0
    %675 = vmatpush1.msra.mxu0 %v639
    %676 = vmatprep.subr.mxu0 0.0
    %677 = vmatpush1.msra.mxu0 %v638
    %678 = vmatprep.subr.mxu0 0.0
    %679 = vmatpush1.msra.mxu0 %v637
    %680 = vmatprep.subr.mxu0 0.0
    %681 = vmatpush1.msra.mxu0 %v636
    %682 = vmatprep.subr.mxu0 0.0
    %683 = vmatpush1.msra.mxu0 %v635
    %684 = vmatprep.subr.mxu0 0.0
    %685 = vmatpush1.msra.mxu0 %v634
    %686 = vmatprep.subr.mxu0 0.0
    %687 = vmatpush2.msra.mxu0 0.0
    %688 = vmatprep.subr.mxu0 0.0
    %689 = vmatpush2.msra.mxu0 0.0
    %690 = vmatprep.subr.mxu0 0.0
    %691 = vmatpush2.msra.mxu0 0.0
    %692 = vmatprep.subr.mxu0 0.0
    %693 = vmatpush2.msra.mxu0 0.0
    %694 = vmatprep.subr.mxu0 0.0
    %695 = vmatpush2.msra.mxu0 0.0
    %696 = vmatprep.subr.mxu0 0.0
    %697 = vmatpush2.msra.mxu0 0.0
    %698 = vmatprep.subr.mxu0 0.0
    %699 = vmatpush2.msra.mxu0 0.0
    %700 = vmatprep.subr.mxu0 0.0
    %701 = vmatpush2.msra.mxu0 0.0
    %702 = vmatprep.subr.mxu0 0.0
    %703 = vmatpush2.msra.mxu0 0.0
    %704 = vmatprep.subr.mxu0 0.0
    %705 = vmatpush2.msra.mxu0 0.0
    %706 = vmatprep.subr.mxu0 0.0
    %707 = vmatpush2.msra.mxu0 0.0
    %708 = vmatprep.subr.mxu0 0.0
    %709 = vmatpush2.msra.mxu0 0.0
    %710 = vmatprep.subr.mxu0 0.0
    %711 = vmatpush2.msra.mxu0 0.0
    %712 = vmatprep.subr.mxu0 0.0
    %713 = vmatpush2.msra.mxu0 0.0
    %714 = vmatprep.subr.mxu0 0.0
    %715 = vmatpush2.msra.mxu0 0.0
    %716 = vmatprep.subr.mxu0 0.0
    %717 = vmatpush2.msra.mxu0 0.0
    %718 = vmatprep.mubr.f32.mxu0 0.0
    %719 = vmatmul.mubr.f32.gmra.mxu0 %v558
    %v720 = vpop.f32.mrf.mxu0
    %v721 = vadd.f32 %v653, %v720
    %v722 = vpop.f32.mrf.mxu0
    %723 = vmatprep.mubr.f32.mxu0 0.0
    %724 = vmatmul.mubr.f32.gmra.mxu0 %v631
    %v725 = vpop.f32.mrf.mxu0
    %v726 = vadd.f32 %v653, %v725
    %v727 = vpop.f32.mrf.mxu0
    %728 = vdwg.mxu0
    %v729 = vadd.f32 %v104, %v721
    %v730 = vadd.f32 %v105, %v726
    %731 = vadd.xlane.f32.xlu0 %v729
    %v732 = vpop.xlane.xlu0 %731
    %733 = vadd.xlane.f32.xlu0 %v730
    %v734 = vpop.xlane.xlu0 %733
    %v735 = vmul.f32 %v732, 0.03125
    %v736 = vmul.f32 %v734, 0.03125
    %v737 = vsub.f32 %v729, %v735
    %v738 = vsub.f32 %v730, %v736
    %v739 = vmul.f32 %v737, %v102
    %v740 = vmul.f32 %v738, %v102
    %v741 = vmul.f32 %v739, %v739
    %v742 = vmul.f32 %v740, %v740
    %743 = vadd.xlane.f32.xlu0 %v741
    %v744 = vpop.xlane.xlu0 %743
    %745 = vadd.xlane.f32.xlu0 %v742
    %v746 = vpop.xlane.xlu0 %745
    %v747 = vmul.f32 %v744, 0.03125
    %v748 = vmul.f32 %v746, 0.03125
    %v749 = vadd.f32 %v747, 1e-05
    %v750 = vadd.f32 %v748, 1e-05
    %v751 = vrsqrt.pop %v749
    %v752 = vrsqrt.pop %v750
    %v753 = vmul.f32 %v737, %v751
    %v754 = vmul.f32 %v738, %v752
    %v755 = vlaneseq
    %v756 = vshrl.u32 %v755, 7
    %v757 = vsub.s32 2, %v756
    %v758 = vrot.slane %v103, %v757
    %v759 = vmul.f32 %v753, %v758
    %v760 = vmul.f32 %v754, %v758
    %v761 = vlaneseq
    %v762 = vshrl.u32 %v761, 7
    %v763 = vsub.s32 3, %v762
    %v764 = vrot.slane %v103, %v763
    %v765 = vadd.f32 %v759, %v764
    %v766 = vadd.f32 %v760, %v764
    %v767 = vld [vmem:[#allocation8] sm:$0xff]
    %v768 = vld [vmem:[#allocation8 + $0x8] sm:$0xff]
    %v769 = vld [vmem:[#allocation8 + $0x10] sm:$0xff]
    %v770 = vld [vmem:[#allocation8 + $0x18] sm:$0xff]
    %v771 = vld [vmem:[#allocation8 + $0x20] sm:$0xff]
    %v772 = vld [vmem:[#allocation8 + $0x28] sm:$0xff]
    %v773 = vld [vmem:[#allocation8 + $0x30] sm:$0xff]
    %v774 = vld [vmem:[#allocation8 + $0x38] sm:$0xff]
    %v775 = vld [vmem:[#allocation8 + $0x40] sm:$0xff]
    %v776 = vld [vmem:[#allocation8 + $0x48] sm:$0xff]
    %v777 = vld [vmem:[#allocation8 + $0x50] sm:$0xff]
    %v778 = vld [vmem:[#allocation8 + $0x58] sm:$0xff]
    %v779 = vld [vmem:[#allocation8 + $0x60] sm:$0xff]
    %v780 = vld [vmem:[#allocation8 + $0x68] sm:$0xff]
    %v781 = vld [vmem:[#allocation8 + $0x70] sm:$0xff]
    %v782 = vld [vmem:[#allocation8 + $0x78] sm:$0xff]
    %v783 = vld [vmem:[%s5] sm:$0x1]
    %v785 = vlaneseq
    %v786 = vshrl.u32 %v785, 7
    %v787 = vsub.s32 0, %v786
    %v788 = vrot.slane %v783, %v787
    %790 = vmatprep.subr.mxu0 0.0
    %791 = vmatpush1.msra.mxu0 %v782
    %792 = vmatprep.subr.mxu0 0.0
    %793 = vmatpush1.msra.mxu0 %v781
    %794 = vmatprep.subr.mxu0 0.0
    %795 = vmatpush1.msra.mxu0 %v780
    %796 = vmatprep.subr.mxu0 0.0
    %797 = vmatpush1.msra.mxu0 %v779
    %798 = vmatprep.subr.mxu0 0.0
    %799 = vmatpush1.msra.mxu0 %v778
    %800 = vmatprep.subr.mxu0 0.0
    %801 = vmatpush1.msra.mxu0 %v777
    %802 = vmatprep.subr.mxu0 0.0
    %803 = vmatpush1.msra.mxu0 %v776
    %804 = vmatprep.subr.mxu0 0.0
    %805 = vmatpush1.msra.mxu0 %v775
    %806 = vmatprep.subr.mxu0 0.0
    %807 = vmatpush1.msra.mxu0 %v774
    %808 = vmatprep.subr.mxu0 0.0
    %809 = vmatpush1.msra.mxu0 %v773
    %810 = vmatprep.subr.mxu0 0.0
    %811 = vmatpush1.msra.mxu0 %v772
    %812 = vmatprep.subr.mxu0 0.0
    %813 = vmatpush1.msra.mxu0 %v771
    %814 = vmatprep.subr.mxu0 0.0
    %815 = vmatpush1.msra.mxu0 %v770
    %816 = vmatprep.subr.mxu0 0.0
    %817 = vmatpush1.msra.mxu0 %v769
    %818 = vmatprep.subr.mxu0 0.0
    %819 = vmatpush1.msra.mxu0 %v768
    %820 = vmatprep.subr.mxu0 0.0
    %821 = vmatpush1.msra.mxu0 %v767
    %822 = vmatprep.subr.mxu0 0.0
    %823 = vmatpush2.msra.mxu0 0.0
    %824 = vmatprep.subr.mxu0 0.0
    %825 = vmatpush2.msra.mxu0 0.0
    %826 = vmatprep.subr.mxu0 0.0
    %827 = vmatpush2.msra.mxu0 0.0
    %828 = vmatprep.subr.mxu0 0.0
    %829 = vmatpush2.msra.mxu0 0.0
    %830 = vmatprep.subr.mxu0 0.0
    %831 = vmatpush2.msra.mxu0 0.0
    %832 = vmatprep.subr.mxu0 0.0
    %833 = vmatpush2.msra.mxu0 0.0
    %834 = vmatprep.subr.mxu0 0.0
    %835 = vmatpush2.msra.mxu0 0.0
    %836 = vmatprep.subr.mxu0 0.0
    %837 = vmatpush2.msra.mxu0 0.0
    %838 = vmatprep.subr.mxu0 0.0
    %839 = vmatpush2.msra.mxu0 0.0
    %840 = vmatprep.subr.mxu0 0.0
    %841 = vmatpush2.msra.mxu0 0.0
    %842 = vmatprep.subr.mxu0 0.0
    %843 = vmatpush2.msra.mxu0 0.0
    %844 = vmatprep.subr.mxu0 0.0
    %845 = vmatpush2.msra.mxu0 0.0
    %846 = vmatprep.subr.mxu0 0.0
    %847 = vmatpush2.msra.mxu0 0.0
    %848 = vmatprep.subr.mxu0 0.0
    %849 = vmatpush2.msra.mxu0 0.0
    %850 = vmatprep.subr.mxu0 0.0
    %851 = vmatpush2.msra.mxu0 0.0
    %852 = vmatprep.subr.mxu0 0.0
    %853 = vmatpush2.msra.mxu0 0.0
    %854 = vmatprep.mubr.f32.mxu0 0.0
    %855 = vmatmul.mubr.f32.gmra.mxu0 %v765
    %v856 = vpop.f32.mrf.mxu0
    %v857 = vadd.f32 %v788, %v856
    %v858 = vpop.f32.mrf.mxu0
    %859 = vmatprep.mubr.f32.mxu0 0.0
    %860 = vmatmul.mubr.f32.gmra.mxu0 %v766
    %v861 = vpop.f32.mrf.mxu0
    %v862 = vadd.f32 %v788, %v861
    %v863 = vpop.f32.mrf.mxu0
    %864 = vdwg.mxu0
    %v865 = vmax.f32 %v857, 0.0
    %v866 = vmax.f32 %v862, 0.0
    %v867 = vld [vmem:[#allocation10] sm:$0xff]
    %v868 = vld [vmem:[#allocation10 + $0x8] sm:$0xff]
    %v869 = vld [vmem:[#allocation10 + $0x10] sm:$0xff]
    %v870 = vld [vmem:[#allocation10 + $0x18] sm:$0xff]
    %v871 = vld [vmem:[#allocation10 + $0x20] sm:$0xff]
    %v872 = vld [vmem:[#allocation10 + $0x28] sm:$0xff]
    %v873 = vld [vmem:[#allocation10 + $0x30] sm:$0xff]
    %v874 = vld [vmem:[#allocation10 + $0x38] sm:$0xff]
    %v875 = vld [vmem:[#allocation10 + $0x40] sm:$0xff]
    %v876 = vld [vmem:[#allocation10 + $0x48] sm:$0xff]
    %v877 = vld [vmem:[#allocation10 + $0x50] sm:$0xff]
    %v878 = vld [vmem:[#allocation10 + $0x58] sm:$0xff]
    %v879 = vld [vmem:[#allocation10 + $0x60] sm:$0xff]
    %v880 = vld [vmem:[#allocation10 + $0x68] sm:$0xff]
    %v881 = vld [vmem:[#allocation10 + $0x70] sm:$0xff]
    %v882 = vld [vmem:[#allocation10 + $0x78] sm:$0xff]
    %v883 = vlaneseq
    %v884 = vshrl.u32 %v883, 7
    %v885 = vsub.s32 1, %v884
    %v886 = vrot.slane %v103, %v885
    %887 = vmatprep.subr.mxu0 0.0
    %888 = vmatpush1.msra.mxu0 %v882
    %889 = vmatprep.subr.mxu0 0.0
    %890 = vmatpush1.msra.mxu0 %v881
    %891 = vmatprep.subr.mxu0 0.0
    %892 = vmatpush1.msra.mxu0 %v880
    %893 = vmatprep.subr.mxu0 0.0
    %894 = vmatpush1.msra.mxu0 %v879
    %895 = vmatprep.subr.mxu0 0.0
    %896 = vmatpush1.msra.mxu0 %v878
    %897 = vmatprep.subr.mxu0 0.0
    %898 = vmatpush1.msra.mxu0 %v877
    %899 = vmatprep.subr.mxu0 0.0
    %900 = vmatpush1.msra.mxu0 %v876
    %901 = vmatprep.subr.mxu0 0.0
    %902 = vmatpush1.msra.mxu0 %v875
    %903 = vmatprep.subr.mxu0 0.0
    %904 = vmatpush1.msra.mxu0 %v874
    %905 = vmatprep.subr.mxu0 0.0
    %906 = vmatpush1.msra.mxu0 %v873
    %907 = vmatprep.subr.mxu0 0.0
    %908 = vmatpush1.msra.mxu0 %v872
    %909 = vmatprep.subr.mxu0 0.0
    %910 = vmatpush1.msra.mxu0 %v871
    %911 = vmatprep.subr.mxu0 0.0
    %912 = vmatpush1.msra.mxu0 %v870
    %913 = vmatprep.subr.mxu0 0.0
    %914 = vmatpush1.msra.mxu0 %v869
    %915 = vmatprep.subr.mxu0 0.0
    %916 = vmatpush1.msra.mxu0 %v868
    %917 = vmatprep.subr.mxu0 0.0
    %918 = vmatpush1.msra.mxu0 %v867
    %919 = vmatprep.subr.mxu0 0.0
    %920 = vmatpush2.msra.mxu0 0.0
    %921 = vmatprep.subr.mxu0 0.0
    %922 = vmatpush2.msra.mxu0 0.0
    %923 = vmatprep.subr.mxu0 0.0
    %924 = vmatpush2.msra.mxu0 0.0
    %925 = vmatprep.subr.mxu0 0.0
    %926 = vmatpush2.msra.mxu0 0.0
    %927 = vmatprep.subr.mxu0 0.0
    %928 = vmatpush2.msra.mxu0 0.0
    %929 = vmatprep.subr.mxu0 0.0
    %930 = vmatpush2.msra.mxu0 0.0
    %931 = vmatprep.subr.mxu0 0.0
    %932 = vmatpush2.msra.mxu0 0.0
    %933 = vmatprep.subr.mxu0 0.0
    %934 = vmatpush2.msra.mxu0 0.0
    %935 = vmatprep.subr.mxu0 0.0
    %936 = vmatpush2.msra.mxu0 0.0
    %937 = vmatprep.subr.mxu0 0.0
    %938 = vmatpush2.msra.mxu0 0.0
    %939 = vmatprep.subr.mxu0 0.0
    %940 = vmatpush2.msra.mxu0 0.0
    %941 = vmatprep.subr.mxu0 0.0
    %942 = vmatpush2.msra.mxu0 0.0
    %943 = vmatprep.subr.mxu0 0.0
    %944 = vmatpush2.msra.mxu0 0.0
    %945 = vmatprep.subr.mxu0 0.0
    %946 = vmatpush2.msra.mxu0 0.0
    %947 = vmatprep.subr.mxu0 0.0
    %948 = vmatpush2.msra.mxu0 0.0
    %949 = vmatprep.subr.mxu0 0.0
    %950 = vmatpush2.msra.mxu0 0.0
    %951 = vmatprep.mubr.f32.mxu0 0.0
    %952 = vmatmul.mubr.f32.gmra.mxu0 %v865
    %v953 = vpop.f32.mrf.mxu0
    %v954 = vadd.f32 %v886, %v953
    %v955 = vpop.f32.mrf.mxu0
    %956 = vmatprep.mubr.f32.mxu0 0.0
    %957 = vmatmul.mubr.f32.gmra.mxu0 %v866
    %v958 = vpop.f32.mrf.mxu0
    %v959 = vadd.f32 %v886, %v958
    %v960 = vpop.f32.mrf.mxu0
    %961 = vdwg.mxu0
    %v962 = vadd.f32 %v765, %v954
    %v963 = vadd.f32 %v766, %v959
    %964 = vadd.xlane.f32.xlu0 %v962
    %v965 = vpop.xlane.xlu0 %964
    %966 = vadd.xlane.f32.xlu0 %v963
    %v967 = vpop.xlane.xlu0 %966
    %v968 = vmul.f32 %v965, 0.03125
    %v969 = vmul.f32 %v967, 0.03125
    %v970 = vsub.f32 %v962, %v968
    %v971 = vsub.f32 %v963, %v969
    %v972 = vmul.f32 %v970, %v102
    %v973 = vmul.f32 %v971, %v102
    %v974 = vmul.f32 %v972, %v972
    %v975 = vmul.f32 %v973, %v973
    %976 = vadd.xlane.f32.xlu0 %v974
    %v977 = vpop.xlane.xlu0 %976
    %978 = vadd.xlane.f32.xlu0 %v975
    %v979 = vpop.xlane.xlu0 %978
    %v980 = vmul.f32 %v977, 0.03125
    %v981 = vmul.f32 %v979, 0.03125
    %v982 = vadd.f32 %v980, 1e-05
    %v983 = vadd.f32 %v981, 1e-05
    %v984 = vrsqrt.pop %v982
    %v985 = vrsqrt.pop %v983
    %v986 = vmul.f32 %v970, %v984
    %v987 = vmul.f32 %v971, %v985
    %v988 = vlaneseq
    %v989 = vshrl.u32 %v988, 7
    %v990 = vsub.s32 4, %v989
    %v991 = vrot.slane %v103, %v990
    %v992 = vmul.f32 %v986, %v991
    %v993 = vmul.f32 %v987, %v991
    %v994 = vlaneseq
    %v995 = vshrl.u32 %v994, 7
    %v996 = vsub.s32 5, %v995
    %v997 = vrot.slane %v103, %v996
    %v998 = vadd.f32 %v992, %v997
    %v999 = vadd.f32 %v993, %v997
    %1000 = vst [vmem:[#allocation11] sm:$0xff] %v998
    %1001 = vst [vmem:[#allocation11 + $0x8] sm:$0xff] %v999
    // Predicated region
    $region54: #{tpu_custom_call.1} parent=1 // pred_check
      _
    $region55: #{tpu_custom_call.1} parent=1 // pred_check_branch
      %1003 = sbr.rel (0) target = $region57
    $region56: #{tpu_custom_call.1} parent=1 // pred_region
      %s1005 = ssub.s32 256, 256
      %1006 = vsyncadd [#allocation4], %s1005
      %s1007 = sshll.u32 [#allocation11], 4
      %s1008 = int_to_ptr.vmem [resolvable:$true] %s1007
      %1013 = dma.vmem_to_hbm [thread:$0]  %s1008, 256, %s8, [#allocation4], 128, 128, 8
    $region57: #{tpu_custom_call.1} parent=1 // pred_fallthru
      _
    // Predicated region
    $region58: #{tpu_custom_call.1} parent=1 // pred_check
      _
    $region59: #{tpu_custom_call.1} parent=1 // pred_check_branch
      %1015 = sbr.rel (0) target = $region61
    $region60: #{tpu_custom_call.1} parent=1 // pred_region
      %1016 = dma.done [#allocation4], 256
    $region61: #{tpu_custom_call.1} parent=1 // pred_fallthru
      _
    %1017 = vsyncpa [#allocation3], 1
    %1018 = vsyncpa [#allocation6], 1
    %1019 = vsyncpa [#allocation9], 1
    %1020 = vsyncpa [#allocation4], 1

</llo_original>
